<compile_context>
chip_gen: v6e
topology: v6e:2x2x1
jax: 0.10.0
libtpu: 0.0.40
codegen_flags: <defaults>
</compile_context>

<pallas_src>
import functools

import jax
import jax.numpy as jnp
from jax.experimental import pallas as pl
from jax.experimental.pallas import tpu as pltpu

EPS = 1e-5  # torch.nn.InstanceNorm2d default


# ---------------------------------------------------------------------------
# Pallas kernel: one batch element per grid step, fully fused residual block.
# Activations live as (Cp, H*W) f32 the whole time (lanes = spatial,
# sublanes = padded channels).
#   x_ref   : (1, Cp, HW)
#   wc*_ref : (3, Cp, 3*Cp)   -- column groups kw in {-1, 0, +1}; within each
#                                group K is ordered kh-major then ci.
#   o_ref   : (1, Cp, HW)
# ---------------------------------------------------------------------------
def _resblock_kernel(x_ref, wc1_ref, wc2_ref, o_ref, *, H, W):
    HW = H * W
    x = x_ref[0].astype(jnp.float32)                      # (Cp, HW)

    # Lane-only edge predicates for reflection padding (broadcast over
    # sublanes inside jnp.where) -- computed once per image.
    lane = jax.lax.broadcasted_iota(jnp.int32, (1, HW), 1)
    row_first = lane < W                                   # spatial row 0
    row_last = lane >= (H - 1) * W                         # spatial row H-1
    colm = lane % W
    col_first = colm == 0                                  # spatial col 0
    col_last = colm == (W - 1)                             # spatial col W-1

    inv_hw = 1.0 / HW

    def conv3x3(a, wc_ref):
        # a: (Cp, HW) f32.  Reflection-padded row shifts via lane rotates
        # (XLU) + edge fix-up; the circular wrap is always overwritten by the
        # edge masks.
        r_prev = pltpu.roll(a, W, axis=1)                  # out[p] = a[p - W]
        r_next = pltpu.roll(a, HW - W, axis=1)             # out[p] = a[p + W]
        a_rm1 = jnp.where(row_first, r_next, r_prev)       # row reflect(i-1)
        a_rp1 = jnp.where(row_last, r_prev, r_next)        # row reflect(i+1)
        R = jnp.concatenate([a_rm1, a, a_rp1], axis=0)     # (3*Cp, HW), aligned
        # Column shifts applied to the whole row-shift stack at once.
        c_prev = pltpu.roll(R, 1, axis=1)                  # out[p] = R[p - 1]
        c_next = pltpu.roll(R, HW - 1, axis=1)             # out[p] = R[p + 1]
        R_cm1 = jnp.where(col_first, c_next, c_prev)       # col reflect(j-1)
        R_cp1 = jnp.where(col_last, c_prev, c_next)        # col reflect(j+1)
        # Three accumulating MXU matmuls (kw = -1, 0, +1) -- no 9*Cp im2col
        # concat; lane-dense (Cp, HW) f32 result.
        out = jnp.dot(wc_ref[0], R_cm1, preferred_element_type=jnp.float32)
        out = out + jnp.dot(wc_ref[1], R, preferred_element_type=jnp.float32)
        out = out + jnp.dot(wc_ref[2], R_cp1, preferred_element_type=jnp.float32)
        return out

    # ---- stage 1: conv -> InstanceNorm -> ReLU (fused) ----------------------
    h = conv3x3(x, wc1_ref)                                # (Cp, HW) f32
    mu1 = jnp.sum(h, axis=1, keepdims=True) * inv_hw
    hc = h - mu1
    var1 = jnp.sum(hc * hc, axis=1, keepdims=True) * inv_hw
    h = jnp.maximum(hc * jax.lax.rsqrt(var1 + EPS), 0.0)

    # ---- stage 2: conv -> InstanceNorm -> residual add (fused) --------------
    g = conv3x3(h, wc2_ref)                                # (Cp, HW) f32
    mu2 = jnp.sum(g, axis=1, keepdims=True) * inv_hw
    gc = g - mu2
    var2 = jnp.sum(gc * gc, axis=1, keepdims=True) * inv_hw
    o_ref[0] = (x + gc * jax.lax.rsqrt(var2 + EPS)).astype(o_ref.dtype)


# ---------------------------------------------------------------------------
# wrapper: PyTorch-convention NCHW in / NCHW out.
#   x: (N, C, H, W); w*: (3, 3, Cin, Cout) i.e. (kh, kw, ci, co); b*: (Cout,)
#   Biases are mathematically cancelled by InstanceNorm(affine=False) and not
#   sent to the kernel (kept in the signature for parity with the module).
# ---------------------------------------------------------------------------
def residual_block_nchw(x, w1, b1, w2, b2):
    del b1, b2  # exactly cancelled by the following InstanceNorm (affine=False)
    N, C, H, W = x.shape
    assert H >= 2 and W >= 2, "ReflectionPad2d(1) requires H,W >= 2"
    HW = H * W
    Cp = ((C + 7) // 8) * 8                                # sublane-pad channels

    x2 = x.reshape(N, C, HW)
    if Cp != C:
        x2 = jnp.pad(x2, ((0, 0), (0, Cp - C), (0, 0)))    # zero-pad channels

    def pack_weights(w):
        # (kh, kw, ci, co) zero-padded to Cp on both channel axes, then split
        # into kw groups; each group laid out (co, kh, ci) -> (Cp, 3*Cp) so K
        # matches the in-kernel row stack [row-1; row; row+1] (kh-major, ci).
        wp = jnp.pad(w.astype(jnp.float32),
                     ((0, 0), (0, 0), (0, Cp - C), (0, Cp - C)))
        groups = [
            jnp.transpose(wp[:, g, :, :], (2, 0, 1)).reshape(Cp, 3 * Cp)
            for g in range(3)
        ]
        return jnp.stack(groups, axis=0)                   # (3, Cp, 3*Cp)

    wc1 = pack_weights(w1)
    wc2 = pack_weights(w2)

    img_spec = pl.BlockSpec((1, Cp, HW), lambda n: (n, 0, 0))
    w_spec = pl.BlockSpec((3, Cp, 3 * Cp), lambda n: (0, 0, 0))

    y2 = pl.pallas_call(
        functools.partial(_resblock_kernel, H=H, W=W),
        out_shape=jax.ShapeDtypeStruct((N, Cp, HW), x.dtype),
        grid_spec=pltpu.PrefetchScalarGridSpec(
            num_scalar_prefetch=0,
            grid=(N,),
            in_specs=[img_spec, w_spec, w_spec],
            out_specs=img_spec,
        ),
        compiler_params=pltpu.CompilerParams(
            dimension_semantics=("parallel",),
        ),
    )(x2, wc1, wc2)
    # Padded channels come out exactly zero; slicing them off is free plumbing.
    return y2[:, :C, :].reshape(N, C, H, W)


# ---------------------------------------------------------------------------
# pure-JAX reference (explicit reflect pad + conv WITH biases + InstanceNorm)
# ---------------------------------------------------------------------------
def _reference_nchw(x, w1, b1, w2, b2):
    def conv(xc, w, b):                                    # xc: (C, H, W)
        xh = jnp.transpose(xc, (1, 2, 0))                  # (H, W, C)
        xp = jnp.pad(xh, ((1, 1), (1, 1), (0, 0)), mode="reflect")
        Hh, Ww, _ = xh.shape
        out = jnp.zeros((Hh, Ww, w.shape[3]), jnp.float32)
        for di in range(3):
            for dj in range(3):
                out = out + jnp.einsum(
                    "hwc,cd->hwd", xp[di:di + Hh, dj:dj + Ww, :], w[di, dj])
        out = out + b
        return jnp.transpose(out, (2, 0, 1))               # (C, H, W)

    def inorm(h):                                          # (C, H, W)
        mu = jnp.mean(h, axis=(1, 2), keepdims=True)
        var = jnp.mean((h - mu) ** 2, axis=(1, 2), keepdims=True)
        return (h - mu) * jax.lax.rsqrt(var + EPS)

    def one(xc):
        h = jnp.maximum(inorm(conv(xc, w1, b1)), 0.0)
        h2 = inorm(conv(h, w2, b2))
        return xc + h2

    return jax.vmap(one)(x)


if __name__ == "__main__":
    N, C, H, W = 2, 4, 16, 16   # ResidualBlock(in_features=4)

    key = jax.random.PRNGKey(0)
    kx, kw1, kb1, kw2, kb2 = jax.random.split(key, 5)

    fan_in = C * 3 * 3
    bound = 1.0 / (fan_in ** 0.5)   # mimic PyTorch conv default init scale
    w1 = jax.random.uniform(kw1, (3, 3, C, C), jnp.float32, -bound, bound)
    b1 = jax.random.uniform(kb1, (C,), jnp.float32, -bound, bound)
    w2 = jax.random.uniform(kw2, (3, 3, C, C), jnp.float32, -bound, bound)
    b2 = jax.random.uniform(kb2, (C,), jnp.float32, -bound, bound)

    x = jax.random.normal(kx, (N, C, H, W), jnp.float32)   # NCHW like PyTorch

    y = jax.block_until_ready(residual_block_nchw(x, w1, b1, w2, b2))

    ref = _reference_nchw(x, w1, b1, w2, b2)
    assert y.shape == x.shape
    assert jnp.allclose(y, ref, atol=1e-4, rtol=1e-4)

    print("KERNEL_OK")
</pallas_src>

<mosaic_0001>
module attributes {stable_mosaic.version = 11 : i64} {
  func.func @_resblock_kernel(%arg0: i32, %arg1: memref<1x8x256xf32, #tpu.memory_space<vmem>>, %arg2: memref<3x8x24xf32, #tpu.memory_space<vmem>>, %arg3: memref<3x8x24xf32, #tpu.memory_space<vmem>>, %arg4: memref<1x8x256xf32, #tpu.memory_space<vmem>>) attributes {dimension_semantics = [#tpu.dimension_semantics<parallel>], iteration_bounds = array<i64: 2>, scalar_prefetch = 0 : i64, scratch_operands = 0 : i64, tpu.core_type = #tpu.core_type<tc>, window_params = [{transform_indices = @transform_0, window_bounds = array<i64: 1, 8, 256>}, {pipeline_mode = #tpu.pipeline_mode<synchronous>, transform_indices = @transform_1, window_bounds = array<i64: 3, 8, 24>}, {pipeline_mode = #tpu.pipeline_mode<synchronous>, transform_indices = @transform_2, window_bounds = array<i64: 3, 8, 24>}, {transform_indices = @transform_3, window_bounds = array<i64: 1, 8, 256>}]} {
    %c0 = arith.constant 0 : index
    %c0_0 = arith.constant 0 : index
    %c0_1 = arith.constant 0 : index
    %0 = vector.load %arg1[%c0, %c0_0, %c0_1] : memref<1x8x256xf32, #tpu.memory_space<vmem>>, vector<1x8x256xf32>
    %1 = vector.shape_cast %0 : vector<1x8x256xf32> to vector<8x256xf32>
    %2 = tpu.iota {dimensions = array<i32: 1>} : vector<1x256xi32>
    %c16_i32 = arith.constant 16 : i32
    %3 = vector.broadcast %c16_i32 : i32 to vector<1x256xi32>
    %4 = arith.cmpi slt, %2, %3 : vector<1x256xi32>
    %c240_i32 = arith.constant 240 : i32
    %5 = vector.broadcast %c240_i32 : i32 to vector<1x256xi32>
    %6 = arith.cmpi sge, %2, %5 : vector<1x256xi32>
    %c16_i32_2 = arith.constant 16 : i32
    %c0_i32 = arith.constant 0 : i32
    %7 = arith.cmpi eq, %c16_i32_2, %c0_i32 : i32
    %c1_i32 = arith.constant 1 : i32
    %8 = arith.select %7, %c1_i32, %c16_i32_2 : i32
    %9 = vector.broadcast %8 : i32 to vector<1x256xi32>
    %10 = arith.remsi %2, %9 : vector<1x256xi32>
    %c0_i32_3 = arith.constant 0 : i32
    %11 = vector.broadcast %c0_i32_3 : i32 to vector<1x256xi32>
    %12 = arith.cmpi ne, %10, %11 : vector<1x256xi32>
    %c0_i32_4 = arith.constant 0 : i32
    %13 = vector.broadcast %c0_i32_4 : i32 to vector<1x256xi32>
    %14 = arith.cmpi slt, %10, %13 : vector<1x256xi32>
    %c0_i32_5 = arith.constant 0 : i32
    %15 = arith.cmpi slt, %8, %c0_i32_5 : i32
    %16 = vector.broadcast %15 : i1 to vector<1x256xi1>
    %17 = vector.broadcast %16 : vector<1x256xi1> to vector<1x256xi1>
    %18 = arith.xori %14, %17 : vector<1x256xi1>
    %19 = arith.andi %18, %12 : vector<1x256xi1>
    %20 = vector.broadcast %8 : i32 to vector<1x256xi32>
    %21 = arith.addi %10, %20 : vector<1x256xi32>
    %22 = arith.select %19, %21, %10 : vector<1x256xi1>, vector<1x256xi32>
    %c0_i32_6 = arith.constant 0 : i32
    %23 = vector.broadcast %c0_i32_6 : i32 to vector<1x256xi32>
    %24 = arith.cmpi eq, %22, %23 : vector<1x256xi32>
    %c15_i32 = arith.constant 15 : i32
    %25 = vector.broadcast %c15_i32 : i32 to vector<1x256xi32>
    %26 = arith.cmpi eq, %22, %25 : vector<1x256xi32>
    %c16_i32_7 = arith.constant 16 : i32
    %27 = tpu.dynamic_rotate %1 by %c16_i32_7 dim 1 : vector<8x256xf32>, i32 -> vector<8x256xf32>
    %c240_i32_8 = arith.constant 240 : i32
    %28 = tpu.dynamic_rotate %1 by %c240_i32_8 dim 1 : vector<8x256xf32>, i32 -> vector<8x256xf32>
    %29 = vector.shape_cast %4 : vector<1x256xi1> to vector<1x256xi1>
    %30 = vector.broadcast %29 : vector<1x256xi1> to vector<8x256xi1>
    %31 = arith.select %30, %28, %27 : vector<8x256xi1>, vector<8x256xf32>
    %32 = vector.shape_cast %6 : vector<1x256xi1> to vector<1x256xi1>
    %33 = vector.broadcast %32 : vector<1x256xi1> to vector<8x256xi1>
    %34 = arith.select %33, %27, %28 : vector<8x256xi1>, vector<8x256xf32>
    %35 = tpu.concatenate %31, %1, %34 in 0 : vector<8x256xf32>, vector<8x256xf32>, vector<8x256xf32> -> vector<24x256xf32>
    %c1_i32_9 = arith.constant 1 : i32
    %36 = tpu.dynamic_rotate %35 by %c1_i32_9 dim 1 : vector<24x256xf32>, i32 -> vector<24x256xf32>
    %c255_i32 = arith.constant 255 : i32
    %37 = tpu.dynamic_rotate %35 by %c255_i32 dim 1 : vector<24x256xf32>, i32 -> vector<24x256xf32>
    %38 = vector.shape_cast %24 : vector<1x256xi1> to vector<1x256xi1>
    %39 = vector.broadcast %38 : vector<1x256xi1> to vector<24x256xi1>
    %40 = arith.select %39, %37, %36 : vector<24x256xi1>, vector<24x256xf32>
    %41 = vector.shape_cast %26 : vector<1x256xi1> to vector<1x256xi1>
    %42 = vector.broadcast %41 : vector<1x256xi1> to vector<24x256xi1>
    %43 = arith.select %42, %36, %37 : vector<24x256xi1>, vector<24x256xf32>
    %c0_10 = arith.constant 0 : index
    %c0_11 = arith.constant 0 : index
    %c0_12 = arith.constant 0 : index
    %44 = vector.load %arg2[%c0_10, %c0_11, %c0_12] : memref<3x8x24xf32, #tpu.memory_space<vmem>>, vector<1x8x24xf32>
    %45 = vector.shape_cast %44 : vector<1x8x24xf32> to vector<8x24xf32>
    %cst = arith.constant dense<0.000000e+00> : vector<8x256xf32>
    %46 = tpu.matmul %45, %40, %cst {dimension_numbers = #tpu.dot_dimension_numbers<[1], [0], [0], [1], [0, 0, 1, 1], [], []>} : vector<8x24xf32>, vector<24x256xf32>, vector<8x256xf32> -> vector<8x256xf32>
    %c1 = arith.constant 1 : index
    %c0_13 = arith.constant 0 : index
    %c0_14 = arith.constant 0 : index
    %47 = vector.load %arg2[%c1, %c0_13, %c0_14] : memref<3x8x24xf32, #tpu.memory_space<vmem>>, vector<1x8x24xf32>
    %48 = vector.shape_cast %47 : vector<1x8x24xf32> to vector<8x24xf32>
    %cst_15 = arith.constant dense<0.000000e+00> : vector<8x256xf32>
    %49 = tpu.matmul %48, %35, %cst_15 {dimension_numbers = #tpu.dot_dimension_numbers<[1], [0], [0], [1], [0, 0, 1, 1], [], []>} : vector<8x24xf32>, vector<24x256xf32>, vector<8x256xf32> -> vector<8x256xf32>
    %50 = arith.addf %46, %49 : vector<8x256xf32>
    %c2 = arith.constant 2 : index
    %c0_16 = arith.constant 0 : index
    %c0_17 = arith.constant 0 : index
    %51 = vector.load %arg2[%c2, %c0_16, %c0_17] : memref<3x8x24xf32, #tpu.memory_space<vmem>>, vector<1x8x24xf32>
    %52 = vector.shape_cast %51 : vector<1x8x24xf32> to vector<8x24xf32>
    %cst_18 = arith.constant dense<0.000000e+00> : vector<8x256xf32>
    %53 = tpu.matmul %52, %43, %cst_18 {dimension_numbers = #tpu.dot_dimension_numbers<[1], [0], [0], [1], [0, 0, 1, 1], [], []>} : vector<8x24xf32>, vector<24x256xf32>, vector<8x256xf32> -> vector<8x256xf32>
    %54 = arith.addf %50, %53 : vector<8x256xf32>
    %cst_19 = arith.constant dense<0.000000e+00> : vector<8xf32>
    %55 = vector.multi_reduction <add>, %54, %cst_19 [1] : vector<8x256xf32> to vector<8xf32>
    %56 = vector.shape_cast %55 : vector<8xf32> to vector<8x1xf32>
    %cst_20 = arith.constant 3.906250e-03 : f32
    %57 = vector.broadcast %cst_20 : f32 to vector<8x1xf32>
    %58 = arith.mulf %56, %57 : vector<8x1xf32>
    %59 = vector.broadcast %58 : vector<8x1xf32> to vector<8x256xf32>
    %60 = arith.subf %54, %59 : vector<8x256xf32>
    %61 = arith.mulf %60, %60 : vector<8x256xf32>
    %cst_21 = arith.constant dense<0.000000e+00> : vector<8xf32>
    %62 = vector.multi_reduction <add>, %61, %cst_21 [1] : vector<8x256xf32> to vector<8xf32>
    %63 = vector.shape_cast %62 : vector<8xf32> to vector<8x1xf32>
    %cst_22 = arith.constant 3.906250e-03 : f32
    %64 = vector.broadcast %cst_22 : f32 to vector<8x1xf32>
    %65 = arith.mulf %63, %64 : vector<8x1xf32>
    %cst_23 = arith.constant 9.99999974E-6 : f32
    %66 = vector.broadcast %cst_23 : f32 to vector<8x1xf32>
    %67 = arith.addf %65, %66 : vector<8x1xf32>
    %68 = math.rsqrt %67 : vector<8x1xf32>
    %69 = vector.broadcast %68 : vector<8x1xf32> to vector<8x256xf32>
    %70 = arith.mulf %60, %69 : vector<8x256xf32>
    %cst_24 = arith.constant 0.000000e+00 : f32
    %71 = vector.broadcast %cst_24 : f32 to vector<8x256xf32>
    %72 = arith.maximumf %70, %71 : vector<8x256xf32>
    %c16_i32_25 = arith.constant 16 : i32
    %73 = tpu.dynamic_rotate %72 by %c16_i32_25 dim 1 : vector<8x256xf32>, i32 -> vector<8x256xf32>
    %c240_i32_26 = arith.constant 240 : i32
    %74 = tpu.dynamic_rotate %72 by %c240_i32_26 dim 1 : vector<8x256xf32>, i32 -> vector<8x256xf32>
    %75 = vector.shape_cast %4 : vector<1x256xi1> to vector<1x256xi1>
    %76 = vector.broadcast %75 : vector<1x256xi1> to vector<8x256xi1>
    %77 = arith.select %76, %74, %73 : vector<8x256xi1>, vector<8x256xf32>
    %78 = vector.shape_cast %6 : vector<1x256xi1> to vector<1x256xi1>
    %79 = vector.broadcast %78 : vector<1x256xi1> to vector<8x256xi1>
    %80 = arith.select %79, %73, %74 : vector<8x256xi1>, vector<8x256xf32>
    %81 = tpu.concatenate %77, %72, %80 in 0 : vector<8x256xf32>, vector<8x256xf32>, vector<8x256xf32> -> vector<24x256xf32>
    %c1_i32_27 = arith.constant 1 : i32
    %82 = tpu.dynamic_rotate %81 by %c1_i32_27 dim 1 : vector<24x256xf32>, i32 -> vector<24x256xf32>
    %c255_i32_28 = arith.constant 255 : i32
    %83 = tpu.dynamic_rotate %81 by %c255_i32_28 dim 1 : vector<24x256xf32>, i32 -> vector<24x256xf32>
    %84 = vector.shape_cast %24 : vector<1x256xi1> to vector<1x256xi1>
    %85 = vector.broadcast %84 : vector<1x256xi1> to vector<24x256xi1>
    %86 = arith.select %85, %83, %82 : vector<24x256xi1>, vector<24x256xf32>
    %87 = vector.shape_cast %26 : vector<1x256xi1> to vector<1x256xi1>
    %88 = vector.broadcast %87 : vector<1x256xi1> to vector<24x256xi1>
    %89 = arith.select %88, %82, %83 : vector<24x256xi1>, vector<24x256xf32>
    %c0_29 = arith.constant 0 : index
    %c0_30 = arith.constant 0 : index
    %c0_31 = arith.constant 0 : index
    %90 = vector.load %arg3[%c0_29, %c0_30, %c0_31] : memref<3x8x24xf32, #tpu.memory_space<vmem>>, vector<1x8x24xf32>
    %91 = vector.shape_cast %90 : vector<1x8x24xf32> to vector<8x24xf32>
    %cst_32 = arith.constant dense<0.000000e+00> : vector<8x256xf32>
    %92 = tpu.matmul %91, %86, %cst_32 {dimension_numbers = #tpu.dot_dimension_numbers<[1], [0], [0], [1], [0, 0, 1, 1], [], []>} : vector<8x24xf32>, vector<24x256xf32>, vector<8x256xf32> -> vector<8x256xf32>
    %c1_33 = arith.constant 1 : index
    %c0_34 = arith.constant 0 : index
    %c0_35 = arith.constant 0 : index
    %93 = vector.load %arg3[%c1_33, %c0_34, %c0_35] : memref<3x8x24xf32, #tpu.memory_space<vmem>>, vector<1x8x24xf32>
    %94 = vector.shape_cast %93 : vector<1x8x24xf32> to vector<8x24xf32>
    %cst_36 = arith.constant dense<0.000000e+00> : vector<8x256xf32>
    %95 = tpu.matmul %94, %81, %cst_36 {dimension_numbers = #tpu.dot_dimension_numbers<[1], [0], [0], [1], [0, 0, 1, 1], [], []>} : vector<8x24xf32>, vector<24x256xf32>, vector<8x256xf32> -> vector<8x256xf32>
    %96 = arith.addf %92, %95 : vector<8x256xf32>
    %c2_37 = arith.constant 2 : index
    %c0_38 = arith.constant 0 : index
    %c0_39 = arith.constant 0 : index
    %97 = vector.load %arg3[%c2_37, %c0_38, %c0_39] : memref<3x8x24xf32, #tpu.memory_space<vmem>>, vector<1x8x24xf32>
    %98 = vector.shape_cast %97 : vector<1x8x24xf32> to vector<8x24xf32>
    %cst_40 = arith.constant dense<0.000000e+00> : vector<8x256xf32>
    %99 = tpu.matmul %98, %89, %cst_40 {dimension_numbers = #tpu.dot_dimension_numbers<[1], [0], [0], [1], [0, 0, 1, 1], [], []>} : vector<8x24xf32>, vector<24x256xf32>, vector<8x256xf32> -> vector<8x256xf32>
    %100 = arith.addf %96, %99 : vector<8x256xf32>
    %cst_41 = arith.constant dense<0.000000e+00> : vector<8xf32>
    %101 = vector.multi_reduction <add>, %100, %cst_41 [1] : vector<8x256xf32> to vector<8xf32>
    %102 = vector.shape_cast %101 : vector<8xf32> to vector<8x1xf32>
    %cst_42 = arith.constant 3.906250e-03 : f32
    %103 = vector.broadcast %cst_42 : f32 to vector<8x1xf32>
    %104 = arith.mulf %102, %103 : vector<8x1xf32>
    %105 = vector.broadcast %104 : vector<8x1xf32> to vector<8x256xf32>
    %106 = arith.subf %100, %105 : vector<8x256xf32>
    %107 = arith.mulf %106, %106 : vector<8x256xf32>
    %cst_43 = arith.constant dense<0.000000e+00> : vector<8xf32>
    %108 = vector.multi_reduction <add>, %107, %cst_43 [1] : vector<8x256xf32> to vector<8xf32>
    %109 = vector.shape_cast %108 : vector<8xf32> to vector<8x1xf32>
    %cst_44 = arith.constant 3.906250e-03 : f32
    %110 = vector.broadcast %cst_44 : f32 to vector<8x1xf32>
    %111 = arith.mulf %109, %110 : vector<8x1xf32>
    %cst_45 = arith.constant 9.99999974E-6 : f32
    %112 = vector.broadcast %cst_45 : f32 to vector<8x1xf32>
    %113 = arith.addf %111, %112 : vector<8x1xf32>
    %114 = math.rsqrt %113 : vector<8x1xf32>
    %115 = vector.broadcast %114 : vector<8x1xf32> to vector<8x256xf32>
    %116 = arith.mulf %106, %115 : vector<8x256xf32>
    %117 = arith.addf %1, %116 : vector<8x256xf32>
    %c0_46 = arith.constant 0 : index
    %c0_47 = arith.constant 0 : index
    %c0_48 = arith.constant 0 : index
    %118 = vector.load %arg4[%c0_46, %c0_47, %c0_48] : memref<1x8x256xf32, #tpu.memory_space<vmem>>, vector<1x8x256xf32>
    %119 = vector.shape_cast %118 : vector<1x8x256xf32> to vector<8x256xf32>
    %120 = vector.shape_cast %117 : vector<8x256xf32> to vector<1x8x256xf32>
    tpu.vector_store %arg4[%c0_46, %c0_47, %c0_48], %120 {strides = array<i32>} : memref<1x8x256xf32, #tpu.memory_space<vmem>>, vector<1x8x256xf32>,
    return
  }
  func.func @transform_0(%arg0: i32) -> (i32, i32, i32) {
    %c0_i32 = arith.constant 0 : i32
    %c0_i32_0 = arith.constant 0 : i32
    %c0_i32_1 = arith.constant 0 : i32
    return %arg0, %c0_i32, %c0_i32_0 : i32, i32, i32
  }
  func.func @transform_1(%arg0: i32) -> (i32, i32, i32) {
    %c0_i32 = arith.constant 0 : i32
    %c0_i32_0 = arith.constant 0 : i32
    %c0_i32_1 = arith.constant 0 : i32
    %c0_i32_2 = arith.constant 0 : i32
    return %c0_i32, %c0_i32_0, %c0_i32_1 : i32, i32, i32
  }
  func.func @transform_2(%arg0: i32) -> (i32, i32, i32) {
    %c0_i32 = arith.constant 0 : i32
    %c0_i32_0 = arith.constant 0 : i32
    %c0_i32_1 = arith.constant 0 : i32
    %c0_i32_2 = arith.constant 0 : i32
    return %c0_i32, %c0_i32_0, %c0_i32_1 : i32, i32, i32
  }
  func.func @transform_3(%arg0: i32) -> (i32, i32, i32) {
    %c0_i32 = arith.constant 0 : i32
    %c0_i32_0 = arith.constant 0 : i32
    %c0_i32_1 = arith.constant 0 : i32
    return %arg0, %c0_i32, %c0_i32_0 : i32, i32, i32
  }
}

</mosaic_0001>

<llo_original>
// kernel: tpu_custom_call.1
$region0: #{tpu_custom_call.1}
  #allocation0 [shape = 'u32[]', space=smem, size = 0x4, offset = 0x4, fixed_abs, tag = 'smem constant byte address 0x4 - core index']
  #allocation1 [shape = 'u32[144,128]{1,0:T(1,128)}', space=vmem, size = 0x12000, scoped, tag = 'internal scratch']
  %s0 = inlined_call_operand.hbm [shape: f32[2,8,256], index: 0, kind: input, shape index: {}]
  %s1 = inlined_call_operand.hbm [shape: f32[3,8,24], index: 1, kind: input, shape index: {}]
  %s2 = inlined_call_operand.hbm [shape: f32[3,8,24], index: 2, kind: input, shape index: {}]
  %s3 = inlined_call_operand.hbm [shape: f32[2,8,256], index: 3, kind: output, shape index: {}]
  %s4 = sld [smem:[#allocation0]]
  $region57: #{tpu_custom_call.1} parent=0
    _
  %s6 = ssub.s32 1, %s4
  %s7 = scalar_select 0, %s6, %s4
  $region1: #{tpu_custom_call.1} parent=0
    #allocation2 [shape = 'u8[16384]{0}', space=vmem, size = 0x4000, scoped, tag = 'input window, operand 0']
    #allocation3 [shape = 's32[2]{0}', space=sflag, size = 0x8, scoped, tag = 'scoped memory for tpu_custom_call.1']
    #allocation4 [shape = 's32[2]{0}', space=sflag, size = 0x8, scoped, tag = 'scoped memory for tpu_custom_call.1']
    #allocation5 [shape = 'u8[12288]{0}', space=vmem, size = 0x3000, scoped, tag = 'input window, operand 1, single buffered']
    #allocation6 [shape = 's32[1]{0}', space=sflag, size = 0x4, scoped, tag = 'scoped memory for tpu_custom_call.1']
    #allocation7 [shape = 'u8[12288]{0}', space=vmem, size = 0x3000, scoped, tag = 'input window, operand 2, single buffered']
    #allocation8 [shape = 'u8[16384]{0}', space=vmem, size = 0x4000, scoped, tag = 'output window, operand 0']
    %8 = vsyncpa [#allocation3], 0
    %s9 = scalar_lea.sflag [#allocation3], 1
    %10 = vsyncpa %s9, 0
    %11 = vsyncpa [#allocation6], 0
    %12 = vsyncpa [#allocation4], 0
    %s13 = scalar_lea.sflag [#allocation4], 1
    %14 = vsyncpa %s13, 0
    loop: start=0, step=1, limit=4
    $region2: #{tpu_custom_call.1} parent=1 // loop_pre_header
      _
    $region3: #{tpu_custom_call.1} parent=1 // loop_header
      %s16 = sphi 0, %s20
      %p17 = scmp.ge.s32.totalorder %s16, 4
      %s26 = sphi 0, %s28
      %s29 = sphi 0, %s26
      %s30 = sphi 0, %s29
      %s46 = sphi 0, %s30
      %s50 = sphi 0, %s50
      %s52 = sphi 0, %s50
      %s53 = sphi 0, %s52
      %s67 = sphi 0, %s53
      %s71 = sphi 0, %s71
      %s73 = sphi 0, %s71
      %s74 = sphi 0, %s73
      %s88 = sphi 0, %s74
      %s94 = sphi 0, %s96
      %s97 = sphi 0, %s94
      %s98 = sphi 0, %s97
      %s114 = sphi 0, %s98
    $region4: #{tpu_custom_call.1} parent=1 // loop_header_branch
      %19 = sbr.rel (%p17) target = $region8
    $region5: #{tpu_custom_call.1} parent=1 // loop_body
      %s21 = ssub.s32 %s16, 1
      %s22 = ssub.s32 %s16, 2
      %s23 = sadd.s32 %s16, 1
      %s24 = ssub.s32 %s16, %s23
      %p25 = scmp.eq.s32.totalorder %s24, 0
      %s27 = sadd.s32 %s26, 1
      %s28 = scalar_select %p25, %s26, %s27
      %p31 = pneg %p25
      %p32 = scmp.eq.s32.totalorder %s16, 1
      %p33 = por %p31, %p32
      %p34 = scmp.ne.s32.totalorder %s26, %s29
      %p35 = scmp.eq.s32.totalorder %s16, 0
      %p36 = por %p34, %p35
      %p37 = scmp.ne.s32.totalorder %s26, %s29
      %p38 = scmp.eq.s32.totalorder %s21, 1
      %p39 = por %p37, %p38
      %p40 = scmp.ne.s32.totalorder %s29, %s30
      %p41 = scmp.eq.s32.totalorder %s21, 0
      %p42 = por %p40, %p41
      %p43 = scmp.ne.s32.totalorder %s29, %s30
      %p44 = scmp.eq.s32.totalorder %s22, 1
      %p45 = por %p43, %p44
      %p47 = scmp.ne.s32.totalorder %s30, %s46
      %p48 = scmp.eq.s32.totalorder %s22, 0
      %p49 = por %p47, %p48
      %s51 = sadd.s32 %s50, 1
      %p54 = scmp.eq.s32.totalorder %s16, 1
      %p55 = scmp.ne.s32.totalorder %s50, %s52
      %p56 = scmp.eq.s32.totalorder %s16, 0
      %p57 = por %p55, %p56
      %p58 = scmp.ne.s32.totalorder %s50, %s52
      %p59 = scmp.eq.s32.totalorder %s21, 1
      %p60 = por %p58, %p59
      %p61 = scmp.ne.s32.totalorder %s52, %s53
      %p62 = scmp.eq.s32.totalorder %s21, 0
      %p63 = por %p61, %p62
      %p64 = scmp.ne.s32.totalorder %s52, %s53
      %p65 = scmp.eq.s32.totalorder %s22, 1
      %p66 = por %p64, %p65
      %p68 = scmp.ne.s32.totalorder %s53, %s67
      %p69 = scmp.eq.s32.totalorder %s22, 0
      %p70 = por %p68, %p69
      %s72 = sadd.s32 %s71, 1
      %p75 = scmp.eq.s32.totalorder %s16, 1
      %p76 = scmp.ne.s32.totalorder %s71, %s73
      %p77 = scmp.eq.s32.totalorder %s16, 0
      %p78 = por %p76, %p77
      %p79 = scmp.ne.s32.totalorder %s71, %s73
      %p80 = scmp.eq.s32.totalorder %s21, 1
      %p81 = por %p79, %p80
      %p82 = scmp.ne.s32.totalorder %s73, %s74
      %p83 = scmp.eq.s32.totalorder %s21, 0
      %p84 = por %p82, %p83
      %p85 = scmp.ne.s32.totalorder %s73, %s74
      %p86 = scmp.eq.s32.totalorder %s22, 1
      %p87 = por %p85, %p86
      %p89 = scmp.ne.s32.totalorder %s74, %s88
      %p90 = scmp.eq.s32.totalorder %s22, 0
      %p91 = por %p89, %p90
      %s92 = ssub.s32 %s16, %s23
      %p93 = scmp.eq.s32.totalorder %s92, 0
      %s95 = sadd.s32 %s94, 1
      %s96 = scalar_select %p93, %s94, %s95
      %p99 = pneg %p93
      %p100 = scmp.eq.s32.totalorder %s16, 1
      %p101 = por %p99, %p100
      %p102 = scmp.ne.s32.totalorder %s94, %s97
      %p103 = scmp.eq.s32.totalorder %s16, 0
      %p104 = por %p102, %p103
      %p105 = scmp.ne.s32.totalorder %s94, %s97
      %p106 = scmp.eq.s32.totalorder %s21, 1
      %p107 = por %p105, %p106
      %p108 = scmp.ne.s32.totalorder %s97, %s98
      %p109 = scmp.eq.s32.totalorder %s21, 0
      %p110 = por %p108, %p109
      %p111 = scmp.ne.s32.totalorder %s97, %s98
      %p112 = scmp.eq.s32.totalorder %s22, 1
      %p113 = por %p111, %p112
      %p115 = scmp.ne.s32.totalorder %s98, %s114
      %p116 = scmp.eq.s32.totalorder %s22, 0
      %p117 = por %p115, %p116
      %p118 = scmp.le.s32.totalorder 1, %s16
      %p119 = scmp.lt.s32.totalorder %s16, 3
      %p120 = pnand %p118, %p119
      %p121 = pneg %p120
      // Predicated region
      $region9: #{tpu_custom_call.1} parent=5 // pred_check
        _
      $region10: #{tpu_custom_call.1} parent=5 // pred_check_branch
        %123 = sbr.rel (%p120) target = $region12
      $region11: #{tpu_custom_call.1} parent=5 // pred_region
        %s124 = ssub.s32 %s16, 1
        // Predicated region
        $region13: #{tpu_custom_call.1} parent=11 // pred_check
          %p125 = pneg %p63
        $region14: #{tpu_custom_call.1} parent=11 // pred_check_branch
          %127 = sbr.rel (%p125) target = $region16
        $region15: #{tpu_custom_call.1} parent=11 // pred_region
          %s129 = ssub.s32 384, 384
          %130 = vsyncadd [#allocation6], %s129
          %s131 = sshll.u32 [#allocation5], 4
          %s132 = int_to_ptr.vmem [resolvable:$true] %s131
          %137 = dma.hbm_to_vmem [thread:$0]  %s1, 384, %s132, [#allocation6], 128, 128, 8
        $region16: #{tpu_custom_call.1} parent=11 // pred_fallthru
          _
        // Predicated region
        $region17: #{tpu_custom_call.1} parent=11 // pred_check
          %p138 = pneg %p84
        $region18: #{tpu_custom_call.1} parent=11 // pred_check_branch
          %140 = sbr.rel (%p138) target = $region20
        $region19: #{tpu_custom_call.1} parent=11 // pred_region
          %s142 = ssub.s32 384, 384
          %143 = vsyncadd [#allocation6], %s142
          %s144 = sshll.u32 [#allocation7], 4
          %s145 = int_to_ptr.vmem [resolvable:$true] %s144
          %150 = dma.hbm_to_vmem [thread:$0]  %s2, 384, %s145, [#allocation6], 128, 128, 8
        $region20: #{tpu_custom_call.1} parent=11 // pred_fallthru
          _
      $region12: #{tpu_custom_call.1} parent=5 // pred_fallthru
        _
      %p151 = scmp.lt.s32.totalorder %s16, 2
      // Predicated region
      $region21: #{tpu_custom_call.1} parent=5 // pred_check
        %p152 = pneg %p151
      $region22: #{tpu_custom_call.1} parent=5 // pred_check_branch
        %154 = sbr.rel (%p152) target = $region24
      $region23: #{tpu_custom_call.1} parent=5 // pred_region
        // Predicated region
        $region25: #{tpu_custom_call.1} parent=23 // pred_check
          %p155 = pneg %p36
        $region26: #{tpu_custom_call.1} parent=23 // pred_check_branch
          %157 = sbr.rel (%p155) target = $region28
        $region27: #{tpu_custom_call.1} parent=23 // pred_region
          %s158 = sand.u32 %s26, 1
          %s159 = scalar_lea.sflag [#allocation3], %s158
          %s160 = sand.u32 %s26, 1
          %s161 = smul.addr %s160, 16
          %s162 = scalar_lea.vmem [#allocation2], %s161
          %s164 = ssub.s32 256, 256
          %165 = vsyncadd %s159, %s164
          %s166 = smul.addr %s16, 2
          %s167 = smul.addr %s166, 128
          %s168 = scalar_lea.hbm %s0, %s167
          %s170 = sshll.u32 %s162, 4
          %s171 = int_to_ptr.vmem [resolvable:$true] %s170
          %173 = dma.hbm_to_vmem [thread:$0]  %s168, 256, %s171, %s159
        $region28: #{tpu_custom_call.1} parent=23 // pred_fallthru
          _
      $region24: #{tpu_custom_call.1} parent=5 // pred_fallthru
        _
      %p174 = scmp.le.s32.totalorder 1, %s16
      %p175 = scmp.lt.s32.totalorder %s16, 3
      %p176 = pnand %p174, %p175
      %p177 = pneg %p176
      // Predicated region
      $region29: #{tpu_custom_call.1} parent=5 // pred_check
        _
      $region30: #{tpu_custom_call.1} parent=5 // pred_check_branch
        %179 = sbr.rel (%p176) target = $region32
      $region31: #{tpu_custom_call.1} parent=5 // pred_region
        %s180 = ssub.s32 %s16, 1
        %s181 = sand.u32 %s29, 1
        %s182 = scalar_lea.sflag [#allocation3], %s181
        %s183 = sand.u32 %s29, 1
        %s184 = smul.addr %s183, 16
        %s185 = scalar_lea.vmem [#allocation2], %s184
        // Predicated region
        $region33: #{tpu_custom_call.1} parent=31 // pred_check
          %p186 = pneg %p42
        $region34: #{tpu_custom_call.1} parent=31 // pred_check_branch
          %188 = sbr.rel (%p186) target = $region36
        $region35: #{tpu_custom_call.1} parent=31 // pred_region
          %189 = dma.done %s182, 256
        $region36: #{tpu_custom_call.1} parent=31 // pred_fallthru
          _
        // Predicated region
        $region37: #{tpu_custom_call.1} parent=31 // pred_check
          %p190 = pneg %p63
        $region38: #{tpu_custom_call.1} parent=31 // pred_check_branch
          %192 = sbr.rel (%p190) target = $region40
        $region39: #{tpu_custom_call.1} parent=31 // pred_region
          %193 = dma.done [#allocation6], 384
        $region40: #{tpu_custom_call.1} parent=31 // pred_fallthru
          _
        // Predicated region
        $region41: #{tpu_custom_call.1} parent=31 // pred_check
          %p194 = pneg %p84
        $region42: #{tpu_custom_call.1} parent=31 // pred_check_branch
          %196 = sbr.rel (%p194) target = $region44
        $region43: #{tpu_custom_call.1} parent=31 // pred_region
          %197 = dma.done [#allocation6], 384
        $region44: #{tpu_custom_call.1} parent=31 // pred_fallthru
          _
        %s198 = sand.u32 %s29, 1
        %s199 = scalar_lea.sflag [#allocation3], %s198
        %s200 = sand.u32 %s29, 1
        %s201 = smul.addr %s200, 16
        %s202 = scalar_lea.vmem [#allocation2], %s201
        %p203 = pneg %p42
        %p204 = pneg %p39
        %p205 = pneg %p63
        %p206 = pneg %p60
        %p207 = pneg %p84
        %p208 = pneg %p81
        %p209 = pneg %p110
        %p210 = pneg %p107
        %s211 = sand.u32 %s97, 1
        %s212 = scalar_lea.sflag [#allocation4], %s211
        %s213 = sand.u32 %s97, 1
        %s214 = smul.addr %s213, 16
        %s215 = scalar_lea.vmem [#allocation8], %s214
        %v216 = vld [vmem:[%s185] sm:$0xff]
        %v217 = vld [vmem:[%s185 + $0x8] sm:$0xff]
        %v218 = vlaneseq
        %v219 = vand.u32 %v218, 127
        %v220 = vadd.s32 %v219, 128
        %vm221 = vcmp.lt.s32.totalorder %v219, 16
        %vm222 = vcmp.lt.s32.totalorder %v220, 16
        %vm223 = vcmp.ge.s32.totalorder %v219, 240
        %vm224 = vcmp.ge.s32.totalorder %v220, 240
        %vm225 = vcmp.lt.s32.totalorder %v219, 0
        %v226 = vsub.s32 0, %v219
        %v227 = vsel %vm225, %v226, %v219
        %v228 = vshrl.u32 %v227, 4
        %v229 = vand.u32 %v227, 15
        %v230 = vsub.s32 0, %v229
        %v231 = vsel %vm225, %v230, %v229
        %vm232 = vcmp.lt.s32.totalorder %v220, 0
        %v233 = vsub.s32 0, %v220
        %v234 = vsel %vm232, %v233, %v220
        %v235 = vshrl.u32 %v234, 4
        %v236 = vand.u32 %v234, 15
        %v237 = vsub.s32 0, %v236
        %v238 = vsel %vm232, %v237, %v236
        %vm239 = vcmp.ne.s32.totalorder %v231, 0
        %vm240 = vcmp.ne.s32.totalorder %v238, 0
        %vm241 = vcmp.lt.s32.totalorder %v231, 0
        %vm242 = vcmp.lt.s32.totalorder %v238, 0
        %vm243 = vmand %vm241, %vm239
        %vm244 = vmand %vm242, %vm240
        %v245 = vadd.s32 %v231, 16
        %v246 = vadd.s32 %v238, 16
        %v247 = vsel %vm243, %v245, %v231
        %v248 = vsel %vm244, %v246, %v238
        %vm249 = vcmp.eq.s32.totalorder %v247, 0
        %vm250 = vcmp.eq.s32.totalorder %v248, 0
        %vm251 = vcmp.eq.s32.totalorder %v247, 15
        %vm252 = vcmp.eq.s32.totalorder %v248, 15
        %253 = vrot.lane.b32.xlu0 %v216, 16
        %v254 = vpop.permute.xlu0 %253
        %255 = vrot.lane.b32.xlu0 %v217, 16
        %v256 = vpop.permute.xlu0 %255
        %v257 = vsel %vm221, %v254, %v256
        %v258 = vsel %vm221, %v256, %v254
        %259 = vrot.lane.b32.xlu0 %v216, 112
        %v260 = vpop.permute.xlu0 %259
        %261 = vrot.lane.b32.xlu0 %v217, 112
        %v262 = vpop.permute.xlu0 %261
        %vm263 = vcmp.lt.s32.totalorder %v219, 112
        %v264 = vsel %vm263, %v260, %v262
        %v265 = vsel %vm263, %v262, %v260
        %v266 = vsel %vm221, 1, 0
        %v267 = vsel %vm222, 1, 0
        %vm268 = vcmp.eq.s32.totalorder %v266, 1
        %vm269 = vcmp.eq.s32.totalorder %v267, 1
        %v270 = vsel %vm268, %v264, %v258
        %v271 = vsel %vm269, %v265, %v257
        %v272 = vsel %vm223, 1, 0
        %v273 = vsel %vm224, 1, 0
        %vm274 = vcmp.eq.s32.totalorder %v272, 1
        %vm275 = vcmp.eq.s32.totalorder %v273, 1
        %v276 = vsel %vm274, %v258, %v264
        %v277 = vsel %vm275, %v257, %v265
        %278 = vrot.lane.b32.xlu0 %v270, 1
        %v279 = vpop.permute.xlu0 %278
        %280 = vrot.lane.b32.xlu0 %v216, 1
        %v281 = vpop.permute.xlu0 %280
        %282 = vrot.lane.b32.xlu0 %v276, 1
        %v283 = vpop.permute.xlu0 %282
        %284 = vrot.lane.b32.xlu0 %v271, 1
        %v285 = vpop.permute.xlu0 %284
        %286 = vrot.lane.b32.xlu0 %v217, 1
        %v287 = vpop.permute.xlu0 %286
        %288 = vrot.lane.b32.xlu0 %v277, 1
        %v289 = vpop.permute.xlu0 %288
        %vm290 = vcmp.lt.s32.totalorder %v219, 1
        %v291 = vsel %vm290, %v279, %v285
        %v292 = vsel %vm290, %v281, %v287
        %v293 = vsel %vm290, %v283, %v289
        %v294 = vsel %vm290, %v285, %v279
        %v295 = vsel %vm290, %v287, %v281
        %v296 = vsel %vm290, %v289, %v283
        %297 = vrot.lane.b32.xlu0 %v270, 127
        %v298 = vpop.permute.xlu0 %297
        %299 = vrot.lane.b32.xlu0 %v216, 127
        %v300 = vpop.permute.xlu0 %299
        %301 = vrot.lane.b32.xlu0 %v276, 127
        %v302 = vpop.permute.xlu0 %301
        %303 = vrot.lane.b32.xlu0 %v271, 127
        %v304 = vpop.permute.xlu0 %303
        %305 = vrot.lane.b32.xlu0 %v217, 127
        %v306 = vpop.permute.xlu0 %305
        %307 = vrot.lane.b32.xlu0 %v277, 127
        %v308 = vpop.permute.xlu0 %307
        %vm309 = vcmp.lt.s32.totalorder %v219, 127
        %v310 = vsel %vm309, %v298, %v304
        %v311 = vsel %vm309, %v300, %v306
        %v312 = vsel %vm309, %v302, %v308
        %v313 = vsel %vm309, %v304, %v298
        %v314 = vsel %vm309, %v306, %v300
        %v315 = vsel %vm309, %v308, %v302
        %v316 = vsel %vm249, 1, 0
        %v317 = vsel %vm250, 1, 0
        %vm318 = vcmp.eq.s32.totalorder %v316, 1
        %vm319 = vcmp.eq.s32.totalorder %v317, 1
        %v320 = vsel %vm318, %v310, %v294
        %v321 = vsel %vm319, %v313, %v291
        %v322 = vsel %vm318, %v311, %v295
        %v323 = vsel %vm319, %v314, %v292
        %v324 = vsel %vm318, %v312, %v296
        %v325 = vsel %vm319, %v315, %v293
        %v326 = vsel %vm251, 1, 0
        %v327 = vsel %vm252, 1, 0
        %vm328 = vcmp.eq.s32.totalorder %v326, 1
        %vm329 = vcmp.eq.s32.totalorder %v327, 1
        %v330 = vsel %vm328, %v294, %v310
        %v331 = vsel %vm329, %v291, %v313
        %v332 = vsel %vm328, %v295, %v311
        %v333 = vsel %vm329, %v292, %v314
        %v334 = vsel %vm328, %v296, %v312
        %v335 = vsel %vm329, %v293, %v315
        %v336 = vld [vmem:[#allocation5] sm:$0xff]
        %s337 = scalar_lea.vmem [#allocation5], 8
        %v338 = vld [vmem:[%s337] sm:$0xff]
        %vm339 = vcmask 195584
        %v341 = vsel %vm339, %v338, 0
        %343 = vmatprep.subr.mxu0 0.0
        %344 = vmatpush1.msra.mxu0 0.0
        %345 = vmatprep.subr.mxu0 0.0
        %346 = vmatpush1.msra.mxu0 0.0
        %347 = vmatprep.subr.mxu0 0.0
        %348 = vmatpush1.msra.mxu0 0.0
        %349 = vmatprep.subr.mxu0 0.0
        %350 = vmatpush1.msra.mxu0 0.0
        %351 = vmatprep.subr.mxu0 0.0
        %352 = vmatpush1.msra.mxu0 0.0
        %353 = vmatprep.subr.mxu0 0.0
        %354 = vmatpush1.msra.mxu0 0.0
        %355 = vmatprep.subr.mxu0 0.0
        %356 = vmatpush1.msra.mxu0 0.0
        %357 = vmatprep.subr.mxu0 0.0
        %358 = vmatpush1.msra.mxu0 0.0
        %359 = vmatprep.subr.mxu0 0.0
        %360 = vmatpush1.msra.mxu0 0.0
        %361 = vmatprep.subr.mxu0 0.0
        %362 = vmatpush1.msra.mxu0 0.0
        %363 = vmatprep.subr.mxu0 0.0
        %364 = vmatpush1.msra.mxu0 0.0
        %365 = vmatprep.subr.mxu0 0.0
        %366 = vmatpush1.msra.mxu0 0.0
        %367 = vmatprep.subr.mxu0 0.0
        %368 = vmatpush1.msra.mxu0 0.0
        %369 = vmatprep.subr.mxu0 %v277
        %370 = vmatpush1.msra.mxu0 %v276
        %371 = vmatprep.subr.mxu0 %v217
        %372 = vmatpush1.msra.mxu0 %v216
        %373 = vmatprep.subr.mxu0 %v271
        %374 = vmatpush1.msra.mxu0 %v270
        %375 = vmatprep.subr.mxu0 0.0
        %376 = vmatpush2.msra.mxu0 0.0
        %377 = vmatprep.subr.mxu0 0.0
        %378 = vmatpush2.msra.mxu0 0.0
        %379 = vmatprep.subr.mxu0 0.0
        %380 = vmatpush2.msra.mxu0 0.0
        %381 = vmatprep.subr.mxu0 0.0
        %382 = vmatpush2.msra.mxu0 0.0
        %383 = vmatprep.subr.mxu0 0.0
        %384 = vmatpush2.msra.mxu0 0.0
        %385 = vmatprep.subr.mxu0 0.0
        %386 = vmatpush2.msra.mxu0 0.0
        %387 = vmatprep.subr.mxu0 0.0
        %388 = vmatpush2.msra.mxu0 0.0
        %389 = vmatprep.subr.mxu0 0.0
        %390 = vmatpush2.msra.mxu0 0.0
        %391 = vmatprep.subr.mxu0 0.0
        %392 = vmatpush2.msra.mxu0 0.0
        %393 = vmatprep.subr.mxu0 0.0
        %394 = vmatpush2.msra.mxu0 0.0
        %395 = vmatprep.subr.mxu0 0.0
        %396 = vmatpush2.msra.mxu0 0.0
        %397 = vmatprep.subr.mxu0 0.0
        %398 = vmatpush2.msra.mxu0 0.0
        %399 = vmatprep.subr.mxu0 0.0
        %400 = vmatpush2.msra.mxu0 0.0
        %401 = vmatprep.subr.mxu0 0.0
        %402 = vmatpush2.msra.mxu0 0.0
        %403 = vmatprep.subr.mxu0 0.0
        %404 = vmatpush2.msra.mxu0 0.0
        %405 = vmatprep.subr.mxu0 0.0
        %406 = vmatpush2.msra.mxu0 0.0
        %407 = vmatprep.mubr.f32.mxu0 0.0
        %408 = vmatmul.mubr.f32.gmra.mxu0 %v341
        %v409 = vpop.f32.mrf.mxu0
        %v410 = vadd.f32 0.0, %v409
        %v411 = vpop.f32.mrf.mxu0
        %v412 = vadd.f32 0.0, %v411
        %413 = vdwg.mxu0
        %v415 = vsel %vm339, %v336, 0
        %417 = vmatprep.subr.mxu0 0.0
        %418 = vmatpush1.msra.mxu0 0.0
        %419 = vmatprep.subr.mxu0 0.0
        %420 = vmatpush1.msra.mxu0 0.0
        %421 = vmatprep.subr.mxu0 0.0
        %422 = vmatpush1.msra.mxu0 0.0
        %423 = vmatprep.subr.mxu0 0.0
        %424 = vmatpush1.msra.mxu0 0.0
        %425 = vmatprep.subr.mxu0 0.0
        %426 = vmatpush1.msra.mxu0 0.0
        %427 = vmatprep.subr.mxu0 0.0
        %428 = vmatpush1.msra.mxu0 0.0
        %429 = vmatprep.subr.mxu0 0.0
        %430 = vmatpush1.msra.mxu0 0.0
        %431 = vmatprep.subr.mxu0 0.0
        %432 = vmatpush1.msra.mxu0 0.0
        %433 = vmatprep.subr.mxu0 0.0
        %434 = vmatpush1.msra.mxu0 0.0
        %435 = vmatprep.subr.mxu0 0.0
        %436 = vmatpush1.msra.mxu0 0.0
        %437 = vmatprep.subr.mxu0 0.0
        %438 = vmatpush1.msra.mxu0 0.0
        %439 = vmatprep.subr.mxu0 0.0
        %440 = vmatpush1.msra.mxu0 0.0
        %441 = vmatprep.subr.mxu0 0.0
        %442 = vmatpush1.msra.mxu0 0.0
        %443 = vmatprep.subr.mxu0 %v325
        %444 = vmatpush1.msra.mxu0 %v324
        %445 = vmatprep.subr.mxu0 %v323
        %446 = vmatpush1.msra.mxu0 %v322
        %447 = vmatprep.subr.mxu0 %v321
        %448 = vmatpush1.msra.mxu0 %v320
        %449 = vmatprep.subr.mxu0 0.0
        %450 = vmatpush2.msra.mxu0 0.0
        %451 = vmatprep.subr.mxu0 0.0
        %452 = vmatpush2.msra.mxu0 0.0
        %453 = vmatprep.subr.mxu0 0.0
        %454 = vmatpush2.msra.mxu0 0.0
        %455 = vmatprep.subr.mxu0 0.0
        %456 = vmatpush2.msra.mxu0 0.0
        %457 = vmatprep.subr.mxu0 0.0
        %458 = vmatpush2.msra.mxu0 0.0
        %459 = vmatprep.subr.mxu0 0.0
        %460 = vmatpush2.msra.mxu0 0.0
        %461 = vmatprep.subr.mxu0 0.0
        %462 = vmatpush2.msra.mxu0 0.0
        %463 = vmatprep.subr.mxu0 0.0
        %464 = vmatpush2.msra.mxu0 0.0
        %465 = vmatprep.subr.mxu0 0.0
        %466 = vmatpush2.msra.mxu0 0.0
        %467 = vmatprep.subr.mxu0 0.0
        %468 = vmatpush2.msra.mxu0 0.0
        %469 = vmatprep.subr.mxu0 0.0
        %470 = vmatpush2.msra.mxu0 0.0
        %471 = vmatprep.subr.mxu0 0.0
        %472 = vmatpush2.msra.mxu0 0.0
        %473 = vmatprep.subr.mxu0 0.0
        %474 = vmatpush2.msra.mxu0 0.0
        %475 = vmatprep.subr.mxu0 0.0
        %476 = vmatpush2.msra.mxu0 0.0
        %477 = vmatprep.subr.mxu0 0.0
        %478 = vmatpush2.msra.mxu0 0.0
        %479 = vmatprep.subr.mxu0 0.0
        %480 = vmatpush2.msra.mxu0 0.0
        %481 = vmatprep.mubr.f32.mxu0 0.0
        %482 = vmatmul.mubr.f32.gmra.mxu0 %v415
        %v483 = vpop.f32.mrf.mxu0
        %v484 = vadd.f32 %v410, %v483
        %v485 = vpop.f32.mrf.mxu0
        %v486 = vadd.f32 %v412, %v485
        %487 = vdwg.mxu0
        %s488 = scalar_lea.vmem [#allocation5], 16
        %v489 = vld [vmem:[%s488] sm:$0xff]
        %v491 = vsel %vm339, %v489, 0
        %493 = vmatprep.subr.mxu0 0.0
        %494 = vmatpush1.msra.mxu0 0.0
        %495 = vmatprep.subr.mxu0 0.0
        %496 = vmatpush1.msra.mxu0 0.0
        %497 = vmatprep.subr.mxu0 0.0
        %498 = vmatpush1.msra.mxu0 0.0
        %499 = vmatprep.subr.mxu0 0.0
        %500 = vmatpush1.msra.mxu0 0.0
        %501 = vmatprep.subr.mxu0 0.0
        %502 = vmatpush1.msra.mxu0 0.0
        %503 = vmatprep.subr.mxu0 0.0
        %504 = vmatpush1.msra.mxu0 0.0
        %505 = vmatprep.subr.mxu0 0.0
        %506 = vmatpush1.msra.mxu0 0.0
        %507 = vmatprep.subr.mxu0 0.0
        %508 = vmatpush1.msra.mxu0 0.0
        %509 = vmatprep.subr.mxu0 0.0
        %510 = vmatpush1.msra.mxu0 0.0
        %511 = vmatprep.subr.mxu0 0.0
        %512 = vmatpush1.msra.mxu0 0.0
        %513 = vmatprep.subr.mxu0 0.0
        %514 = vmatpush1.msra.mxu0 0.0
        %515 = vmatprep.subr.mxu0 0.0
        %516 = vmatpush1.msra.mxu0 0.0
        %517 = vmatprep.subr.mxu0 0.0
        %518 = vmatpush1.msra.mxu0 0.0
        %519 = vmatprep.subr.mxu0 %v335
        %520 = vmatpush1.msra.mxu0 %v334
        %521 = vmatprep.subr.mxu0 %v333
        %522 = vmatpush1.msra.mxu0 %v332
        %523 = vmatprep.subr.mxu0 %v331
        %524 = vmatpush1.msra.mxu0 %v330
        %525 = vmatprep.subr.mxu0 0.0
        %526 = vmatpush2.msra.mxu0 0.0
        %527 = vmatprep.subr.mxu0 0.0
        %528 = vmatpush2.msra.mxu0 0.0
        %529 = vmatprep.subr.mxu0 0.0
        %530 = vmatpush2.msra.mxu0 0.0
        %531 = vmatprep.subr.mxu0 0.0
        %532 = vmatpush2.msra.mxu0 0.0
        %533 = vmatprep.subr.mxu0 0.0
        %534 = vmatpush2.msra.mxu0 0.0
        %535 = vmatprep.subr.mxu0 0.0
        %536 = vmatpush2.msra.mxu0 0.0
        %537 = vmatprep.subr.mxu0 0.0
        %538 = vmatpush2.msra.mxu0 0.0
        %539 = vmatprep.subr.mxu0 0.0
        %540 = vmatpush2.msra.mxu0 0.0
        %541 = vmatprep.subr.mxu0 0.0
        %542 = vmatpush2.msra.mxu0 0.0
        %543 = vmatprep.subr.mxu0 0.0
        %544 = vmatpush2.msra.mxu0 0.0
        %545 = vmatprep.subr.mxu0 0.0
        %546 = vmatpush2.msra.mxu0 0.0
        %547 = vmatprep.subr.mxu0 0.0
        %548 = vmatpush2.msra.mxu0 0.0
        %549 = vmatprep.subr.mxu0 0.0
        %550 = vmatpush2.msra.mxu0 0.0
        %551 = vmatprep.subr.mxu0 0.0
        %552 = vmatpush2.msra.mxu0 0.0
        %553 = vmatprep.subr.mxu0 0.0
        %554 = vmatpush2.msra.mxu0 0.0
        %555 = vmatprep.subr.mxu0 0.0
        %556 = vmatpush2.msra.mxu0 0.0
        %557 = vmatprep.mubr.f32.mxu0 0.0
        %558 = vmatmul.mubr.f32.gmra.mxu0 %v491
        %v559 = vpop.f32.mrf.mxu0
        %v560 = vadd.f32 0.0, %v559
        %v561 = vpop.f32.mrf.mxu0
        %v562 = vadd.f32 0.0, %v561
        %563 = vdwg.mxu0
        %v564 = vadd.f32 %v484, %v560
        %v565 = vadd.f32 %v486, %v562
        %v566 = vadd.f32 %v564, %v565
        %567 = vadd.xlane.f32.xlu0 %v566
        %v568 = vpop.xlane.xlu0 %567
        %v569 = vmul.f32 %v568, 0.00390625
        %v570 = vsub.f32 %v564, %v569
        %v571 = vsub.f32 %v565, %v569
        %v572 = vmul.f32 %v570, %v570
        %v573 = vmul.f32 %v571, %v571
        %v574 = vadd.f32 %v572, %v573
        %575 = vadd.xlane.f32.xlu0 %v574
        %v576 = vpop.xlane.xlu0 %575
        %v577 = vmul.f32 %v576, 0.00390625
        %v578 = vadd.f32 %v577, 1e-05
        %v579 = vrsqrt.pop %v578
        %v580 = vmul.f32 %v570, %v579
        %v581 = vmul.f32 %v571, %v579
        %v582 = vmax.f32 %v580, 0.0
        %v583 = vmax.f32 %v581, 0.0
        %584 = vrot.lane.b32.xlu0 %v582, 16
        %v585 = vpop.permute.xlu0 %584
        %586 = vrot.lane.b32.xlu0 %v583, 16
        %v587 = vpop.permute.xlu0 %586
        %v588 = vsel %vm221, %v585, %v587
        %v589 = vsel %vm221, %v587, %v585
        %590 = vrot.lane.b32.xlu0 %v582, 112
        %v591 = vpop.permute.xlu0 %590
        %592 = vrot.lane.b32.xlu0 %v583, 112
        %v593 = vpop.permute.xlu0 %592
        %v594 = vsel %vm263, %v591, %v593
        %v595 = vsel %vm263, %v593, %v591
        %v596 = vsel %vm268, %v594, %v589
        %v597 = vsel %vm269, %v595, %v588
        %v598 = vsel %vm274, %v589, %v594
        %v599 = vsel %vm275, %v588, %v595
        %600 = vrot.lane.b32.xlu0 %v596, 1
        %v601 = vpop.permute.xlu0 %600
        %602 = vrot.lane.b32.xlu0 %v582, 1
        %v603 = vpop.permute.xlu0 %602
        %604 = vrot.lane.b32.xlu0 %v598, 1
        %v605 = vpop.permute.xlu0 %604
        %606 = vrot.lane.b32.xlu0 %v597, 1
        %v607 = vpop.permute.xlu0 %606
        %608 = vrot.lane.b32.xlu0 %v583, 1
        %v609 = vpop.permute.xlu0 %608
        %610 = vrot.lane.b32.xlu0 %v599, 1
        %v611 = vpop.permute.xlu0 %610
        %v612 = vsel %vm290, %v601, %v607
        %v613 = vsel %vm290, %v603, %v609
        %v614 = vsel %vm290, %v605, %v611
        %v615 = vsel %vm290, %v607, %v601
        %v616 = vsel %vm290, %v609, %v603
        %v617 = vsel %vm290, %v611, %v605
        %618 = vrot.lane.b32.xlu0 %v596, 127
        %v619 = vpop.permute.xlu0 %618
        %620 = vrot.lane.b32.xlu0 %v582, 127
        %v621 = vpop.permute.xlu0 %620
        %622 = vrot.lane.b32.xlu0 %v598, 127
        %v623 = vpop.permute.xlu0 %622
        %624 = vrot.lane.b32.xlu0 %v597, 127
        %v625 = vpop.permute.xlu0 %624
        %626 = vrot.lane.b32.xlu0 %v583, 127
        %v627 = vpop.permute.xlu0 %626
        %628 = vrot.lane.b32.xlu0 %v599, 127
        %v629 = vpop.permute.xlu0 %628
        %v630 = vsel %vm309, %v619, %v625
        %v631 = vsel %vm309, %v621, %v627
        %v632 = vsel %vm309, %v623, %v629
        %v633 = vsel %vm309, %v625, %v619
        %v634 = vsel %vm309, %v627, %v621
        %v635 = vsel %vm309, %v629, %v623
        %v636 = vsel %vm318, %v630, %v615
        %v637 = vsel %vm319, %v633, %v612
        %v638 = vsel %vm318, %v631, %v616
        %v639 = vsel %vm319, %v634, %v613
        %v640 = vsel %vm318, %v632, %v617
        %v641 = vsel %vm319, %v635, %v614
        %v642 = vsel %vm328, %v615, %v630
        %v643 = vsel %vm329, %v612, %v633
        %v644 = vsel %vm328, %v616, %v631
        %v645 = vsel %vm329, %v613, %v634
        %v646 = vsel %vm328, %v617, %v632
        %v647 = vsel %vm329, %v614, %v635
        %v648 = vld [vmem:[#allocation7] sm:$0xff]
        %s649 = scalar_lea.vmem [#allocation7], 8
        %v650 = vld [vmem:[%s649] sm:$0xff]
        %v652 = vsel %vm339, %v650, 0
        %654 = vmatprep.subr.mxu0 0.0
        %655 = vmatpush1.msra.mxu0 0.0
        %656 = vmatprep.subr.mxu0 0.0
        %657 = vmatpush1.msra.mxu0 0.0
        %658 = vmatprep.subr.mxu0 0.0
        %659 = vmatpush1.msra.mxu0 0.0
        %660 = vmatprep.subr.mxu0 0.0
        %661 = vmatpush1.msra.mxu0 0.0
        %662 = vmatprep.subr.mxu0 0.0
        %663 = vmatpush1.msra.mxu0 0.0
        %664 = vmatprep.subr.mxu0 0.0
        %665 = vmatpush1.msra.mxu0 0.0
        %666 = vmatprep.subr.mxu0 0.0
        %667 = vmatpush1.msra.mxu0 0.0
        %668 = vmatprep.subr.mxu0 0.0
        %669 = vmatpush1.msra.mxu0 0.0
        %670 = vmatprep.subr.mxu0 0.0
        %671 = vmatpush1.msra.mxu0 0.0
        %672 = vmatprep.subr.mxu0 0.0
        %673 = vmatpush1.msra.mxu0 0.0
        %674 = vmatprep.subr.mxu0 0.0
        %675 = vmatpush1.msra.mxu0 0.0
        %676 = vmatprep.subr.mxu0 0.0
        %677 = vmatpush1.msra.mxu0 0.0
        %678 = vmatprep.subr.mxu0 0.0
        %679 = vmatpush1.msra.mxu0 0.0
        %680 = vmatprep.subr.mxu0 %v599
        %681 = vmatpush1.msra.mxu0 %v598
        %682 = vmatprep.subr.mxu0 %v583
        %683 = vmatpush1.msra.mxu0 %v582
        %684 = vmatprep.subr.mxu0 %v597
        %685 = vmatpush1.msra.mxu0 %v596
        %686 = vmatprep.subr.mxu0 0.0
        %687 = vmatpush2.msra.mxu0 0.0
        %688 = vmatprep.subr.mxu0 0.0
        %689 = vmatpush2.msra.mxu0 0.0
        %690 = vmatprep.subr.mxu0 0.0
        %691 = vmatpush2.msra.mxu0 0.0
        %692 = vmatprep.subr.mxu0 0.0
        %693 = vmatpush2.msra.mxu0 0.0
        %694 = vmatprep.subr.mxu0 0.0
        %695 = vmatpush2.msra.mxu0 0.0
        %696 = vmatprep.subr.mxu0 0.0
        %697 = vmatpush2.msra.mxu0 0.0
        %698 = vmatprep.subr.mxu0 0.0
        %699 = vmatpush2.msra.mxu0 0.0
        %700 = vmatprep.subr.mxu0 0.0
        %701 = vmatpush2.msra.mxu0 0.0
        %702 = vmatprep.subr.mxu0 0.0
        %703 = vmatpush2.msra.mxu0 0.0
        %704 = vmatprep.subr.mxu0 0.0
        %705 = vmatpush2.msra.mxu0 0.0
        %706 = vmatprep.subr.mxu0 0.0
        %707 = vmatpush2.msra.mxu0 0.0
        %708 = vmatprep.subr.mxu0 0.0
        %709 = vmatpush2.msra.mxu0 0.0
        %710 = vmatprep.subr.mxu0 0.0
        %711 = vmatpush2.msra.mxu0 0.0
        %712 = vmatprep.subr.mxu0 0.0
        %713 = vmatpush2.msra.mxu0 0.0
        %714 = vmatprep.subr.mxu0 0.0
        %715 = vmatpush2.msra.mxu0 0.0
        %716 = vmatprep.subr.mxu0 0.0
        %717 = vmatpush2.msra.mxu0 0.0
        %718 = vmatprep.mubr.f32.mxu0 0.0
        %719 = vmatmul.mubr.f32.gmra.mxu0 %v652
        %v720 = vpop.f32.mrf.mxu0
        %v721 = vadd.f32 0.0, %v720
        %v722 = vpop.f32.mrf.mxu0
        %v723 = vadd.f32 0.0, %v722
        %724 = vdwg.mxu0
        %v726 = vsel %vm339, %v648, 0
        %728 = vmatprep.subr.mxu0 0.0
        %729 = vmatpush1.msra.mxu0 0.0
        %730 = vmatprep.subr.mxu0 0.0
        %731 = vmatpush1.msra.mxu0 0.0
        %732 = vmatprep.subr.mxu0 0.0
        %733 = vmatpush1.msra.mxu0 0.0
        %734 = vmatprep.subr.mxu0 0.0
        %735 = vmatpush1.msra.mxu0 0.0
        %736 = vmatprep.subr.mxu0 0.0
        %737 = vmatpush1.msra.mxu0 0.0
        %738 = vmatprep.subr.mxu0 0.0
        %739 = vmatpush1.msra.mxu0 0.0
        %740 = vmatprep.subr.mxu0 0.0
        %741 = vmatpush1.msra.mxu0 0.0
        %742 = vmatprep.subr.mxu0 0.0
        %743 = vmatpush1.msra.mxu0 0.0
        %744 = vmatprep.subr.mxu0 0.0
        %745 = vmatpush1.msra.mxu0 0.0
        %746 = vmatprep.subr.mxu0 0.0
        %747 = vmatpush1.msra.mxu0 0.0
        %748 = vmatprep.subr.mxu0 0.0
        %749 = vmatpush1.msra.mxu0 0.0
        %750 = vmatprep.subr.mxu0 0.0
        %751 = vmatpush1.msra.mxu0 0.0
        %752 = vmatprep.subr.mxu0 0.0
        %753 = vmatpush1.msra.mxu0 0.0
        %754 = vmatprep.subr.mxu0 %v641
        %755 = vmatpush1.msra.mxu0 %v640
        %756 = vmatprep.subr.mxu0 %v639
        %757 = vmatpush1.msra.mxu0 %v638
        %758 = vmatprep.subr.mxu0 %v637
        %759 = vmatpush1.msra.mxu0 %v636
        %760 = vmatprep.subr.mxu0 0.0
        %761 = vmatpush2.msra.mxu0 0.0
        %762 = vmatprep.subr.mxu0 0.0
        %763 = vmatpush2.msra.mxu0 0.0
        %764 = vmatprep.subr.mxu0 0.0
        %765 = vmatpush2.msra.mxu0 0.0
        %766 = vmatprep.subr.mxu0 0.0
        %767 = vmatpush2.msra.mxu0 0.0
        %768 = vmatprep.subr.mxu0 0.0
        %769 = vmatpush2.msra.mxu0 0.0
        %770 = vmatprep.subr.mxu0 0.0
        %771 = vmatpush2.msra.mxu0 0.0
        %772 = vmatprep.subr.mxu0 0.0
        %773 = vmatpush2.msra.mxu0 0.0
        %774 = vmatprep.subr.mxu0 0.0
        %775 = vmatpush2.msra.mxu0 0.0
        %776 = vmatprep.subr.mxu0 0.0
        %777 = vmatpush2.msra.mxu0 0.0
        %778 = vmatprep.subr.mxu0 0.0
        %779 = vmatpush2.msra.mxu0 0.0
        %780 = vmatprep.subr.mxu0 0.0
        %781 = vmatpush2.msra.mxu0 0.0
        %782 = vmatprep.subr.mxu0 0.0
        %783 = vmatpush2.msra.mxu0 0.0
        %784 = vmatprep.subr.mxu0 0.0
        %785 = vmatpush2.msra.mxu0 0.0
        %786 = vmatprep.subr.mxu0 0.0
        %787 = vmatpush2.msra.mxu0 0.0
        %788 = vmatprep.subr.mxu0 0.0
        %789 = vmatpush2.msra.mxu0 0.0
        %790 = vmatprep.subr.mxu0 0.0
        %791 = vmatpush2.msra.mxu0 0.0
        %792 = vmatprep.mubr.f32.mxu0 0.0
        %793 = vmatmul.mubr.f32.gmra.mxu0 %v726
        %v794 = vpop.f32.mrf.mxu0
        %v795 = vadd.f32 %v721, %v794
        %v796 = vpop.f32.mrf.mxu0
        %v797 = vadd.f32 %v723, %v796
        %798 = vdwg.mxu0
        %s799 = scalar_lea.vmem [#allocation7], 16
        %v800 = vld [vmem:[%s799] sm:$0xff]
        %v802 = vsel %vm339, %v800, 0
        %804 = vmatprep.subr.mxu0 0.0
        %805 = vmatpush1.msra.mxu0 0.0
        %806 = vmatprep.subr.mxu0 0.0
        %807 = vmatpush1.msra.mxu0 0.0
        %808 = vmatprep.subr.mxu0 0.0
        %809 = vmatpush1.msra.mxu0 0.0
        %810 = vmatprep.subr.mxu0 0.0
        %811 = vmatpush1.msra.mxu0 0.0
        %812 = vmatprep.subr.mxu0 0.0
        %813 = vmatpush1.msra.mxu0 0.0
        %814 = vmatprep.subr.mxu0 0.0
        %815 = vmatpush1.msra.mxu0 0.0
        %816 = vmatprep.subr.mxu0 0.0
        %817 = vmatpush1.msra.mxu0 0.0
        %818 = vmatprep.subr.mxu0 0.0
        %819 = vmatpush1.msra.mxu0 0.0
        %820 = vmatprep.subr.mxu0 0.0
        %821 = vmatpush1.msra.mxu0 0.0
        %822 = vmatprep.subr.mxu0 0.0
        %823 = vmatpush1.msra.mxu0 0.0
        %824 = vmatprep.subr.mxu0 0.0
        %825 = vmatpush1.msra.mxu0 0.0
        %826 = vmatprep.subr.mxu0 0.0
        %827 = vmatpush1.msra.mxu0 0.0
        %828 = vmatprep.subr.mxu0 0.0
        %829 = vmatpush1.msra.mxu0 0.0
        %830 = vmatprep.subr.mxu0 %v647
        %831 = vmatpush1.msra.mxu0 %v646
        %832 = vmatprep.subr.mxu0 %v645
        %833 = vmatpush1.msra.mxu0 %v644
        %834 = vmatprep.subr.mxu0 %v643
        %835 = vmatpush1.msra.mxu0 %v642
        %836 = vmatprep.subr.mxu0 0.0
        %837 = vmatpush2.msra.mxu0 0.0
        %838 = vmatprep.subr.mxu0 0.0
        %839 = vmatpush2.msra.mxu0 0.0
        %840 = vmatprep.subr.mxu0 0.0
        %841 = vmatpush2.msra.mxu0 0.0
        %842 = vmatprep.subr.mxu0 0.0
        %843 = vmatpush2.msra.mxu0 0.0
        %844 = vmatprep.subr.mxu0 0.0
        %845 = vmatpush2.msra.mxu0 0.0
        %846 = vmatprep.subr.mxu0 0.0
        %847 = vmatpush2.msra.mxu0 0.0
        %848 = vmatprep.subr.mxu0 0.0
        %849 = vmatpush2.msra.mxu0 0.0
        %850 = vmatprep.subr.mxu0 0.0
        %851 = vmatpush2.msra.mxu0 0.0
        %852 = vmatprep.subr.mxu0 0.0
        %853 = vmatpush2.msra.mxu0 0.0
        %854 = vmatprep.subr.mxu0 0.0
        %855 = vmatpush2.msra.mxu0 0.0
        %856 = vmatprep.subr.mxu0 0.0
        %857 = vmatpush2.msra.mxu0 0.0
        %858 = vmatprep.subr.mxu0 0.0
        %859 = vmatpush2.msra.mxu0 0.0
        %860 = vmatprep.subr.mxu0 0.0
        %861 = vmatpush2.msra.mxu0 0.0
        %862 = vmatprep.subr.mxu0 0.0
        %863 = vmatpush2.msra.mxu0 0.0
        %864 = vmatprep.subr.mxu0 0.0
        %865 = vmatpush2.msra.mxu0 0.0
        %866 = vmatprep.subr.mxu0 0.0
        %867 = vmatpush2.msra.mxu0 0.0
        %868 = vmatprep.mubr.f32.mxu0 0.0
        %869 = vmatmul.mubr.f32.gmra.mxu0 %v802
        %v870 = vpop.f32.mrf.mxu0
        %v871 = vadd.f32 0.0, %v870
        %v872 = vpop.f32.mrf.mxu0
        %v873 = vadd.f32 0.0, %v872
        %874 = vdwg.mxu0
        %v875 = vadd.f32 %v795, %v871
        %v876 = vadd.f32 %v797, %v873
        %v877 = vadd.f32 %v875, %v876
        %878 = vadd.xlane.f32.xlu0 %v877
        %v879 = vpop.xlane.xlu0 %878
        %v880 = vmul.f32 %v879, 0.00390625
        %v881 = vsub.f32 %v875, %v880
        %v882 = vsub.f32 %v876, %v880
        %v883 = vmul.f32 %v881, %v881
        %v884 = vmul.f32 %v882, %v882
        %v885 = vadd.f32 %v883, %v884
        %886 = vadd.xlane.f32.xlu0 %v885
        %v887 = vpop.xlane.xlu0 %886
        %v888 = vmul.f32 %v887, 0.00390625
        %v889 = vadd.f32 %v888, 1e-05
        %v890 = vrsqrt.pop %v889
        %v891 = vmul.f32 %v881, %v890
        %v892 = vmul.f32 %v882, %v890
        %v893 = vadd.f32 %v216, %v891
        %v894 = vadd.f32 %v217, %v892
        %895 = vst [vmem:[%s215] sm:$0xff] %v893
        %896 = vst [vmem:[%s215 + $0x8] sm:$0xff] %v894
        %s897 = sand.u32 %s97, 1
        %s898 = scalar_lea.sflag [#allocation4], %s897
        %s899 = sand.u32 %s97, 1
        %s900 = smul.addr %s899, 16
        %s901 = scalar_lea.vmem [#allocation8], %s900
        // Predicated region
        $region45: #{tpu_custom_call.1} parent=31 // pred_check
          %p902 = pneg %p107
        $region46: #{tpu_custom_call.1} parent=31 // pred_check_branch
          %904 = sbr.rel (%p902) target = $region48
        $region47: #{tpu_custom_call.1} parent=31 // pred_region
          %s906 = ssub.s32 256, 256
          %907 = vsyncadd %s898, %s906
          %s908 = smul.addr %s21, 2
          %s909 = smul.addr %s908, 128
          %s910 = scalar_lea.hbm %s3, %s909
          %s912 = sshll.u32 %s901, 4
          %s913 = int_to_ptr.vmem [resolvable:$true] %s912
          %915 = dma.vmem_to_hbm [thread:$0]  %s913, 256, %s910, %s898
        $region48: #{tpu_custom_call.1} parent=31 // pred_fallthru
          _
      $region32: #{tpu_custom_call.1} parent=5 // pred_fallthru
        _
      %p916 = scmp.le.s32.totalorder 2, %s16
      // Predicated region
      $region49: #{tpu_custom_call.1} parent=5 // pred_check
        %p917 = pneg %p916
      $region50: #{tpu_custom_call.1} parent=5 // pred_check_branch
        %919 = sbr.rel (%p917) target = $region52
      $region51: #{tpu_custom_call.1} parent=5 // pred_region
        %s920 = ssub.s32 %s16, 2
        // Predicated region
        $region53: #{tpu_custom_call.1} parent=51 // pred_check
          %p921 = pneg %p113
        $region54: #{tpu_custom_call.1} parent=51 // pred_check_branch
          %923 = sbr.rel (%p921) target = $region56
        $region55: #{tpu_custom_call.1} parent=51 // pred_region
          %s924 = sand.u32 %s98, 1
          %s925 = scalar_lea.sflag [#allocation4], %s924
          %s926 = sand.u32 %s98, 1
          %s927 = smul.addr %s926, 16
          %s928 = scalar_lea.vmem [#allocation8], %s927
          %929 = dma.done %s925, 256
        $region56: #{tpu_custom_call.1} parent=51 // pred_fallthru
          _
      $region52: #{tpu_custom_call.1} parent=5 // pred_fallthru
        _
    $region6: #{tpu_custom_call.1} parent=1 // loop_footer
      %s20 = sadd.s32 1, %s16
    $region7: #{tpu_custom_call.1} parent=1 // loop_footer_branch
      %15 = sbr.rel target = $region3
    $region8: #{tpu_custom_call.1} parent=1 // loop_exit
      _
    %930 = vsyncpa [#allocation3], 1
    %s931 = scalar_lea.sflag [#allocation3], 1
    %932 = vsyncpa %s931, 1
    %933 = vsyncpa [#allocation6], 1
    %934 = vsyncpa [#allocation4], 1
    %s935 = scalar_lea.sflag [#allocation4], 1
    %936 = vsyncpa %s935, 1

</llo_original>
